<compile_context>
chip_gen: v6e
topology: v6e:2x2x1
jax: 0.10.0
libtpu: 0.0.40
codegen_flags: <defaults>
</compile_context>

<pallas_src>
import functools

import jax
import jax.numpy as jnp
from jax import lax
from jax.experimental import pallas as pl
from jax.experimental.pallas import tpu as pltpu

ALPHA = 0.25
GAMMA = 2.0  # applied as an explicit square in the kernel


def _focal_loss_kernel(logits_ref, targets_ref, out_ref, *, n_valid: int):
    pid = pl.program_id(0)

    logits = logits_ref[...].astype(jnp.float32)   # (tile_n, C), cast in-kernel
    targets = targets_ref[...]                     # (tile_n, 1) int32
    tn, c = logits.shape

    # Numerically-stable softmax pieces over the true class width.
    # (Block last dim == full C, so there are no pad lanes to mask here.)
    row_max = jnp.max(logits, axis=-1, keepdims=True)              # (tn, 1)
    shifted = logits - row_max
    exp_shifted = jnp.exp(shifted)
    sum_exp = jnp.sum(exp_shifted, axis=-1, keepdims=True)         # (tn, 1)

    # Target-class "gather": a single select + one row reduce.
    class_ids = lax.broadcasted_iota(jnp.int32, (tn, c), 1)
    picked_shifted = jnp.sum(
        jnp.where(class_ids == targets, shifted, 0.0),
        axis=-1, keepdims=True)                                    # logit_t - max

    # Cross-entropy and p_t; narrow (tn,1) exp + approx EUP reciprocal instead
    # of a second full-width reduce.  Clamp tiny negative roundoff.
    ce = jnp.maximum(jnp.log(sum_exp) - picked_shifted, 0.0)       # (tn, 1)
    pt = jnp.exp(picked_shifted) * pl.reciprocal(sum_exp, approx=True)
    one_minus_pt = jnp.maximum(1.0 - pt, 0.0)
    focal = ALPHA * one_minus_pt * one_minus_pt * ce               # gamma == 2

    # Rows past the true batch size (overhang of the last tile) hold undefined
    # data -> select (not multiply), so Inf/NaN cannot poison the sum.
    row_ids = pid * tn + lax.broadcasted_iota(jnp.int32, (tn, 1), 0)
    part = jnp.sum(jnp.where(row_ids < n_valid, focal, 0.0))

    # Lane-dense, (8,128)-aligned partial-sum slab (value broadcast; ~4 KiB).
    out_ref[...] = jnp.full(out_ref.shape, part, dtype=jnp.float32)


def focal_loss(logits: jax.Array, targets: jax.Array,
               tile_n: int | None = None) -> jax.Array:
    """logits: (N, C) float (f32/bf16), targets: (N,) int -> scalar f32 loss."""
    n, c = logits.shape

    if tile_n is None:
        # ~2 MiB of f32 compute footprint per block; double-buffered inputs
        # plus a few tile-sized intermediates stay far below the VMEM limit.
        budget_rows = (2 * 1024 * 1024) // (c * 4)
        tile_n = min(8192, max(8, budget_rows))
    if n >= 8:
        tile_n = max(8, (min(tile_n, n) // 8) * 8)   # multiple of 8, never > n
    else:
        tile_n = n                                   # tiny batch: block == full dim
    grid_n = pl.cdiv(n, tile_n)

    targets_2d = targets.astype(jnp.int32).reshape(n, 1)
    kernel = functools.partial(_focal_loss_kernel, n_valid=n)

    partials = pl.pallas_call(
        kernel,
        out_shape=jax.ShapeDtypeStruct((grid_n, 8, 128), jnp.float32),
        grid=(grid_n,),
        in_specs=[
            pl.BlockSpec((tile_n, c), lambda i: (i, 0)),   # original dtype, no pad
            pl.BlockSpec((tile_n, 1), lambda i: (i, 0)),
        ],
        out_specs=pl.BlockSpec((1, 8, 128), lambda i: (i, 0, 0)),
        compiler_params=pltpu.CompilerParams(
            dimension_semantics=("parallel",),   # independent per-tile partials
            vmem_limit_bytes=48 * 1024 * 1024,
        ),
    )(logits, targets_2d)

    # Tiny final reduction over grid_n partials + mean over true N.
    return jnp.sum(partials[:, 0, 0]) / jnp.float32(n)


def focal_loss_ref(logits, targets):
    # Pure-JAX reference mirroring the PyTorch module.
    logp = jax.nn.log_softmax(logits.astype(jnp.float32), axis=-1)
    ce = -jnp.take_along_axis(logp, targets[:, None], axis=-1)[:, 0]
    pt = jnp.exp(-ce)
    return jnp.mean(ALPHA * (1.0 - pt) ** GAMMA * ce)


if __name__ == "__main__":
    key = jax.random.PRNGKey(0)
    k1, k2, k3, k4 = jax.random.split(key, 4)

    # Tolerance note: pl.reciprocal(approx=True) on the EUP introduces ~1e-4
    # relative error in pt, so compare with a few-per-mille rtol.

    # Case 1: f32 logits, multi-tile grid (parallel per-tile partials path).
    N1, C1 = 64, 32
    logits1 = jax.random.normal(k1, (N1, C1), dtype=jnp.float32)
    targets1 = jax.random.randint(k2, (N1,), 0, C1, dtype=jnp.int32)
    loss1 = focal_loss(logits1, targets1, tile_n=16)   # grid = 4
    jax.block_until_ready(loss1)
    ref1 = focal_loss_ref(logits1, targets1)
    assert jnp.allclose(loss1, ref1, atol=1e-4, rtol=5e-3), (loss1, ref1)

    # Case 2: bf16 logits (cast happens in-kernel), N not a multiple of the
    # tile -> the last block overhangs the array and is masked via jnp.where.
    N2, C2 = 40, 10
    logits2 = jax.random.normal(k3, (N2, C2), dtype=jnp.bfloat16)
    targets2 = jax.random.randint(k4, (N2,), 0, C2, dtype=jnp.int32)
    loss2 = focal_loss(logits2, targets2, tile_n=16)   # grid = 3, last tile partial
    jax.block_until_ready(loss2)
    ref2 = focal_loss_ref(logits2, targets2)
    assert jnp.allclose(loss2, ref2, atol=1e-4, rtol=5e-3), (loss2, ref2)

    print("KERNEL_OK")
</pallas_src>

<mosaic_0001>
module attributes {stable_mosaic.version = 11 : i64} {
  func.func @_focal_loss_kernel(%arg0: i32, %arg1: memref<16x32xf32, #tpu.memory_space<vmem>>, %arg2: memref<16x1xi32, #tpu.memory_space<vmem>>, %arg3: memref<1x8x128xf32, #tpu.memory_space<vmem>>) attributes {dimension_semantics = [#tpu.dimension_semantics<parallel>], iteration_bounds = array<i64: 4>, scalar_prefetch = 0 : i64, scratch_operands = 0 : i64, tpu.core_type = #tpu.core_type<tc>, window_params = [{transform_indices = @transform_0, window_bounds = array<i64: 16, 32>}, {transform_indices = @transform_1, window_bounds = array<i64: 16, 1>}, {transform_indices = @transform_2, window_bounds = array<i64: 1, 8, 128>}]} {
    %c0 = arith.constant 0 : index
    %c0_0 = arith.constant 0 : index
    %0 = vector.load %arg1[%c0, %c0_0] : memref<16x32xf32, #tpu.memory_space<vmem>>, vector<16x32xf32>
    %c0_1 = arith.constant 0 : index
    %c0_2 = arith.constant 0 : index
    %1 = vector.load %arg2[%c0_1, %c0_2] : memref<16x1xi32, #tpu.memory_space<vmem>>, vector<16x1xi32>
    %cst = arith.constant dense<0xFF800000> : vector<16xf32>
    %2 = vector.multi_reduction <maximumf>, %0, %cst [1] : vector<16x32xf32> to vector<16xf32>
    %3 = vector.shape_cast %2 : vector<16xf32> to vector<16x1xf32>
    %4 = vector.broadcast %3 : vector<16x1xf32> to vector<16x32xf32>
    %5 = arith.subf %0, %4 : vector<16x32xf32>
    %6 = math.exp %5 : vector<16x32xf32>
    %cst_3 = arith.constant dense<0.000000e+00> : vector<16xf32>
    %7 = vector.multi_reduction <add>, %6, %cst_3 [1] : vector<16x32xf32> to vector<16xf32>
    %8 = vector.shape_cast %7 : vector<16xf32> to vector<16x1xf32>
    %9 = tpu.iota {dimensions = array<i32: 1>} : vector<16x32xi32>
    %10 = vector.broadcast %1 : vector<16x1xi32> to vector<16x32xi32>
    %11 = arith.cmpi eq, %9, %10 : vector<16x32xi32>
    %cst_4 = arith.constant 0.000000e+00 : f32
    %12 = vector.broadcast %cst_4 : f32 to vector<16x32xf32>
    %13 = arith.select %11, %5, %12 : vector<16x32xi1>, vector<16x32xf32>
    %cst_5 = arith.constant dense<0.000000e+00> : vector<16xf32>
    %14 = vector.multi_reduction <add>, %13, %cst_5 [1] : vector<16x32xf32> to vector<16xf32>
    %15 = vector.shape_cast %14 : vector<16xf32> to vector<16x1xf32>
    %16 = math.log %8 : vector<16x1xf32>
    %17 = arith.subf %16, %15 : vector<16x1xf32>
    %cst_6 = arith.constant 0.000000e+00 : f32
    %18 = vector.broadcast %cst_6 : f32 to vector<16x1xf32>
    %19 = arith.maximumf %17, %18 : vector<16x1xf32>
    %20 = math.exp %15 : vector<16x1xf32>
    %21 = tpu.reciprocal %8 {approx = true} : vector<16x1xf32> -> vector<16x1xf32>
    %22 = arith.mulf %20, %21 : vector<16x1xf32>
    %cst_7 = arith.constant 1.000000e+00 : f32
    %23 = vector.broadcast %cst_7 : f32 to vector<16x1xf32>
    %24 = arith.subf %23, %22 : vector<16x1xf32>
    %cst_8 = arith.constant 0.000000e+00 : f32
    %25 = vector.broadcast %cst_8 : f32 to vector<16x1xf32>
    %26 = arith.maximumf %24, %25 : vector<16x1xf32>
    %cst_9 = arith.constant 2.500000e-01 : f32
    %27 = vector.broadcast %cst_9 : f32 to vector<16x1xf32>
    %28 = arith.mulf %27, %26 : vector<16x1xf32>
    %29 = arith.mulf %28, %26 : vector<16x1xf32>
    %30 = arith.mulf %29, %19 : vector<16x1xf32>
    %c16_i32 = arith.constant 16 : i32
    %31 = arith.muli %arg0, %c16_i32 : i32
    %32 = tpu.iota {dimensions = array<i32: 0>} : vector<16x1xi32>
    %33 = vector.broadcast %31 : i32 to vector<16x1xi32>
    %34 = arith.addi %33, %32 : vector<16x1xi32>
    %c64_i32 = arith.constant 64 : i32
    %35 = vector.broadcast %c64_i32 : i32 to vector<16x1xi32>
    %36 = arith.cmpi slt, %34, %35 : vector<16x1xi32>
    %cst_10 = arith.constant 0.000000e+00 : f32
    %37 = vector.broadcast %cst_10 : f32 to vector<16x1xf32>
    %38 = arith.select %36, %30, %37 : vector<16x1xi1>, vector<16x1xf32>
    %39 = vector.shape_cast %38 : vector<16x1xf32> to vector<1x16x1xf32>
    %cst_11 = arith.constant dense<0.000000e+00> : vector<1xf32>
    %40 = vector.multi_reduction <add>, %39, %cst_11 [1, 2] : vector<1x16x1xf32> to vector<1xf32>
    %41 = vector.shape_cast %40 : vector<1xf32> to vector<1x1x1xf32>
    %42 = vector.extract %41[0, 0, 0] : f32 from vector<1x1x1xf32>
    %43 = vector.broadcast %42 : f32 to vector<1x8x128xf32>
    %c0_12 = arith.constant 0 : index
    %c0_13 = arith.constant 0 : index
    %c0_14 = arith.constant 0 : index
    %44 = vector.load %arg3[%c0_12, %c0_13, %c0_14] : memref<1x8x128xf32, #tpu.memory_space<vmem>>, vector<1x8x128xf32>
    tpu.vector_store %arg3[%c0_12, %c0_13, %c0_14], %43 {strides = array<i32>} : memref<1x8x128xf32, #tpu.memory_space<vmem>>, vector<1x8x128xf32>,
    return
  }
  func.func @transform_0(%arg0: i32) -> (i32, i32) {
    %c0_i32 = arith.constant 0 : i32
    %c0_i32_0 = arith.constant 0 : i32
    return %arg0, %c0_i32 : i32, i32
  }
  func.func @transform_1(%arg0: i32) -> (i32, i32) {
    %c0_i32 = arith.constant 0 : i32
    %c0_i32_0 = arith.constant 0 : i32
    return %arg0, %c0_i32 : i32, i32
  }
  func.func @transform_2(%arg0: i32) -> (i32, i32, i32) {
    %c0_i32 = arith.constant 0 : i32
    %c0_i32_0 = arith.constant 0 : i32
    %c0_i32_1 = arith.constant 0 : i32
    return %arg0, %c0_i32, %c0_i32_0 : i32, i32, i32
  }
}

</mosaic_0001>

<llo_original>
// kernel: tpu_custom_call.1
$region0: #{tpu_custom_call.1}
  #allocation0 [shape = 'u32[]', space=smem, size = 0x4, offset = 0x4, fixed_abs, tag = 'smem constant byte address 0x4 - core index']
  #allocation1 [shape = 'u32[144,128]{1,0:T(1,128)}', space=vmem, size = 0x12000, scoped, tag = 'internal scratch']
  %s0 = inlined_call_operand.vmem [shape: f32[64,32], index: 0, kind: input, shape index: {}]
  %s1 = inlined_call_operand.vmem [shape: s32[64,1], index: 1, kind: input, shape index: {}]
  %s2 = inlined_call_operand.hbm [shape: f32[4,8,128], index: 2, kind: output, shape index: {}]
  %s3 = sld [smem:[#allocation0]]
  $region41: #{tpu_custom_call.1} parent=0
    _
  %s5 = ssub.s32 1, %s3
  %s6 = scalar_select 0, %s5, %s3
  $region1: #{tpu_custom_call.1} parent=0
    #allocation2 [shape = 'u8[8192]{0}', space=vmem, size = 0x2000, scoped, tag = 'output window, operand 0']
    #allocation3 [shape = 's32[2]{0}', space=sflag, size = 0x8, scoped, tag = 'scoped memory for tpu_custom_call.1']
    %7 = vsyncpa [#allocation3], 0
    %s8 = scalar_lea.sflag [#allocation3], 1
    %9 = vsyncpa %s8, 0
    loop: start=0, step=1, limit=6
    $region2: #{tpu_custom_call.1} parent=1 // loop_pre_header
      _
    $region3: #{tpu_custom_call.1} parent=1 // loop_header
      %s11 = sphi 0, %s15
      %p12 = scmp.ge.s32.totalorder %s11, 6
      %s21 = sphi 0, %s23
      %s24 = sphi 0, %s21
      %s25 = sphi 0, %s24
      %s41 = sphi 0, %s25
      %s47 = sphi 0, %s49
      %s50 = sphi 0, %s47
      %s51 = sphi 0, %s50
      %s67 = sphi 0, %s51
      %s73 = sphi 0, %s75
      %s76 = sphi 0, %s73
      %s77 = sphi 0, %s76
      %s93 = sphi 0, %s77
    $region4: #{tpu_custom_call.1} parent=1 // loop_header_branch
      %14 = sbr.rel (%p12) target = $region8
    $region5: #{tpu_custom_call.1} parent=1 // loop_body
      %s16 = ssub.s32 %s11, 1
      %s17 = ssub.s32 %s11, 2
      %s18 = sadd.s32 %s11, 1
      %s19 = ssub.s32 %s11, %s18
      %p20 = scmp.eq.s32.totalorder %s19, 0
      %s22 = sadd.s32 %s21, 1
      %s23 = scalar_select %p20, %s21, %s22
      %p26 = pneg %p20
      %p27 = scmp.eq.s32.totalorder %s11, 3
      %p28 = por %p26, %p27
      %p29 = scmp.ne.s32.totalorder %s21, %s24
      %p30 = scmp.eq.s32.totalorder %s11, 0
      %p31 = por %p29, %p30
      %p32 = scmp.ne.s32.totalorder %s21, %s24
      %p33 = scmp.eq.s32.totalorder %s16, 3
      %p34 = por %p32, %p33
      %p35 = scmp.ne.s32.totalorder %s24, %s25
      %p36 = scmp.eq.s32.totalorder %s16, 0
      %p37 = por %p35, %p36
      %p38 = scmp.ne.s32.totalorder %s24, %s25
      %p39 = scmp.eq.s32.totalorder %s17, 3
      %p40 = por %p38, %p39
      %p42 = scmp.ne.s32.totalorder %s25, %s41
      %p43 = scmp.eq.s32.totalorder %s17, 0
      %p44 = por %p42, %p43
      %s45 = ssub.s32 %s11, %s18
      %p46 = scmp.eq.s32.totalorder %s45, 0
      %s48 = sadd.s32 %s47, 1
      %s49 = scalar_select %p46, %s47, %s48
      %p52 = pneg %p46
      %p53 = scmp.eq.s32.totalorder %s11, 3
      %p54 = por %p52, %p53
      %p55 = scmp.ne.s32.totalorder %s47, %s50
      %p56 = scmp.eq.s32.totalorder %s11, 0
      %p57 = por %p55, %p56
      %p58 = scmp.ne.s32.totalorder %s47, %s50
      %p59 = scmp.eq.s32.totalorder %s16, 3
      %p60 = por %p58, %p59
      %p61 = scmp.ne.s32.totalorder %s50, %s51
      %p62 = scmp.eq.s32.totalorder %s16, 0
      %p63 = por %p61, %p62
      %p64 = scmp.ne.s32.totalorder %s50, %s51
      %p65 = scmp.eq.s32.totalorder %s17, 3
      %p66 = por %p64, %p65
      %p68 = scmp.ne.s32.totalorder %s51, %s67
      %p69 = scmp.eq.s32.totalorder %s17, 0
      %p70 = por %p68, %p69
      %s71 = ssub.s32 %s11, %s18
      %p72 = scmp.eq.s32.totalorder %s71, 0
      %s74 = sadd.s32 %s73, 1
      %s75 = scalar_select %p72, %s73, %s74
      %p78 = pneg %p72
      %p79 = scmp.eq.s32.totalorder %s11, 3
      %p80 = por %p78, %p79
      %p81 = scmp.ne.s32.totalorder %s73, %s76
      %p82 = scmp.eq.s32.totalorder %s11, 0
      %p83 = por %p81, %p82
      %p84 = scmp.ne.s32.totalorder %s73, %s76
      %p85 = scmp.eq.s32.totalorder %s16, 3
      %p86 = por %p84, %p85
      %p87 = scmp.ne.s32.totalorder %s76, %s77
      %p88 = scmp.eq.s32.totalorder %s16, 0
      %p89 = por %p87, %p88
      %p90 = scmp.ne.s32.totalorder %s76, %s77
      %p91 = scmp.eq.s32.totalorder %s17, 3
      %p92 = por %p90, %p91
      %p94 = scmp.ne.s32.totalorder %s77, %s93
      %p95 = scmp.eq.s32.totalorder %s17, 0
      %p96 = por %p94, %p95
      %p97 = scmp.le.s32.totalorder 1, %s11
      %p98 = scmp.lt.s32.totalorder %s11, 5
      %p99 = pnand %p97, %p98
      %p100 = pneg %p99
      // Predicated region
      $region9: #{tpu_custom_call.1} parent=5 // pred_check
        _
      $region10: #{tpu_custom_call.1} parent=5 // pred_check_branch
        %102 = sbr.rel (%p99) target = $region12
      $region11: #{tpu_custom_call.1} parent=5 // pred_region
        %s103 = ssub.s32 %s11, 1
      $region12: #{tpu_custom_call.1} parent=5 // pred_fallthru
        _
      %p104 = scmp.lt.s32.totalorder %s11, 4
      // Predicated region
      $region13: #{tpu_custom_call.1} parent=5 // pred_check
        %p105 = pneg %p104
      $region14: #{tpu_custom_call.1} parent=5 // pred_check_branch
        %107 = sbr.rel (%p105) target = $region16
      $region15: #{tpu_custom_call.1} parent=5 // pred_region
        // Predicated region
        $region17: #{tpu_custom_call.1} parent=15 // pred_check
          %p108 = pneg %p31
        $region18: #{tpu_custom_call.1} parent=15 // pred_check_branch
          %110 = sbr.rel (%p108) target = $region20
        $region19: #{tpu_custom_call.1} parent=15 // pred_region
          %s111 = smul.u32 2, %s11
          %p112 = scmp.lt.s32.totalorder %s111, 7
          %s113 = scalar_select %p112, %s111, 7
          %s114 = smul.addr %s113, 8
          %s115 = scalar_lea.vmem %s0, %s114
          %s116 = smul.u32 2, %s11
        $region20: #{tpu_custom_call.1} parent=15 // pred_fallthru
          _
        // Predicated region
        $region21: #{tpu_custom_call.1} parent=15 // pred_check
          %p117 = pneg %p57
        $region22: #{tpu_custom_call.1} parent=15 // pred_check_branch
          %119 = sbr.rel (%p117) target = $region24
        $region23: #{tpu_custom_call.1} parent=15 // pred_region
          %s120 = smul.u32 2, %s11
          %p121 = scmp.lt.s32.totalorder %s120, 7
          %s122 = scalar_select %p121, %s120, 7
          %s123 = smul.addr %s122, 8
          %s124 = scalar_lea.vmem %s1, %s123
          %s125 = smul.u32 2, %s11
        $region24: #{tpu_custom_call.1} parent=15 // pred_fallthru
          _
      $region16: #{tpu_custom_call.1} parent=5 // pred_fallthru
        _
      %p126 = scmp.le.s32.totalorder 1, %s11
      %p127 = scmp.lt.s32.totalorder %s11, 5
      %p128 = pnand %p126, %p127
      %p129 = pneg %p128
      // Predicated region
      $region25: #{tpu_custom_call.1} parent=5 // pred_check
        _
      $region26: #{tpu_custom_call.1} parent=5 // pred_check_branch
        %131 = sbr.rel (%p128) target = $region28
      $region27: #{tpu_custom_call.1} parent=5 // pred_region
        %s132 = ssub.s32 %s11, 1
        %s133 = smul.u32 2, %s16
        %p134 = scmp.lt.s32.totalorder %s133, 7
        %s135 = scalar_select %p134, %s133, 7
        %s136 = smul.addr %s135, 8
        %s137 = scalar_lea.vmem %s0, %s136
        %p138 = pneg %p37
        %p139 = pneg %p34
        %s140 = smul.u32 2, %s16
        %p141 = scmp.lt.s32.totalorder %s140, 7
        %s142 = scalar_select %p141, %s140, 7
        %s143 = smul.addr %s142, 8
        %s144 = scalar_lea.vmem %s1, %s143
        %p145 = pneg %p63
        %p146 = pneg %p60
        %p147 = pneg %p89
        %p148 = pneg %p86
        %s149 = sand.u32 %s76, 1
        %s150 = scalar_lea.sflag [#allocation3], %s149
        %s151 = sand.u32 %s76, 1
        %s152 = smul.addr %s151, 8
        %s153 = scalar_lea.vmem [#allocation2], %s152
        %s154 = smul.u32 2, %s16
        %p155 = scmp.lt.s32.totalorder %s154, 7
        %s156 = scalar_select %p155, %s154, 7
        %s157 = smul.addr %s156, 8
        %s158 = scalar_lea.vmem %s0, %s157
        %s159 = smul.u32 2, %s16
        %s160 = smul.u32 2, %s16
        %p161 = scmp.lt.s32.totalorder %s160, 7
        %s162 = scalar_select %p161, %s160, 7
        %s163 = smul.addr %s162, 8
        %s164 = scalar_lea.vmem %s1, %s163
        %s165 = smul.u32 2, %s16
        %v166 = vld [vmem:[%s158] sm:$0xff]
        %v167 = vld [vmem:[%s158 + $0x8] sm:$0xff]
        %v168 = vld [vmem:[%s164] sm:$0xff]
        %v169 = vld [vmem:[%s164 + $0x8] sm:$0xff]
        %vm170 = vcmask 261120
        %v171 = vsel %vm170, %v166, -inf
        %172 = vmax.xlane.f32.xlu0 %v171
        %v173 = vpop.xlane.xlu0 %172
        %v174 = vsel %vm170, %v167, -inf
        %175 = vmax.xlane.f32.xlu0 %v174
        %v176 = vpop.xlane.xlu0 %175
        %v177 = vsub.f32 %v166, %v173
        %v178 = vsub.f32 %v167, %v176
        %v179 = vmul.f32 %v177, 1.442695
        %v180 = vpow.pop %v179
        %v181 = vmul.f32 %v178, 1.442695
        %v182 = vpow.pop %v181
        %v183 = vsel %vm170, %v180, 0.0
        %184 = vadd.xlane.f32.xlu0 %v183
        %v185 = vpop.xlane.xlu0 %184
        %v186 = vsel %vm170, %v182, 0.0
        %187 = vadd.xlane.f32.xlu0 %v186
        %v188 = vpop.xlane.xlu0 %187
        %v189 = vlaneseq
        %v190 = vand.u32 %v189, 127
        %191 = vset.pattern.permute.xlu0 0
        %192 = vperm.xlu0 %191, %v168
        %v193 = vpop.permute.xlu0 %192
        %194 = vset.pattern.permute.xlu0 0
        %195 = vperm.xlu0 %194, %v169
        %v196 = vpop.permute.xlu0 %195
        %vm197 = vcmp.eq.s32.totalorder %v190, %v193
        %vm198 = vcmp.eq.s32.totalorder %v190, %v196
        %v199 = vsel %vm197, %v177, 0.0
        %v200 = vsel %vm198, %v178, 0.0
        %v201 = vsel %vm170, %v199, 0.0
        %202 = vadd.xlane.f32.xlu0 %v201
        %v203 = vpop.xlane.xlu0 %202
        %v204 = vsel %vm170, %v200, 0.0
        %205 = vadd.xlane.f32.xlu0 %v204
        %v206 = vpop.xlane.xlu0 %205
        %v207 = vlog2.pop %v185
        %v208 = vmul.f32 %v207, 0.6931472
        %v209 = vlog2.pop %v188
        %v210 = vmul.f32 %v209, 0.6931472
        %v211 = vsub.f32 %v208, %v203
        %v212 = vsub.f32 %v210, %v206
        %v213 = vmax.f32 %v211, 0.0
        %v214 = vmax.f32 %v212, 0.0
        %v215 = vmul.f32 %v203, 1.442695
        %v216 = vpow.pop %v215
        %v217 = vmul.f32 %v206, 1.442695
        %v218 = vpow.pop %v217
        %v219 = vrcp.pop %v185
        %v220 = vrcp.pop %v188
        %v221 = vmul.f32 %v216, %v219
        %v222 = vmul.f32 %v218, %v220
        %v223 = vsub.f32 1.0, %v221
        %v224 = vsub.f32 1.0, %v222
        %v225 = vmax.f32 %v223, 0.0
        %v226 = vmax.f32 %v224, 0.0
        %v227 = vmul.f32 %v225, 0.25
        %v228 = vmul.f32 %v226, 0.25
        %v229 = vmul.f32 %v227, %v225
        %v230 = vmul.f32 %v228, %v226
        %v231 = vmul.f32 %v229, %v213
        %v232 = vmul.f32 %v230, %v214
        %s233 = smul.u32 %s16, 16
        %v234 = vlaneseq
        %v235 = vshrl.u32 %v234, 7
        %v236 = vadd.s32 %v235, 8
        %v237 = vstv %s233
        %v238 = vadd.s32 %v237, %v235
        %v239 = vadd.s32 %v237, %v236
        %vm240 = vcmp.lt.s32.totalorder %v238, 64
        %vm241 = vcmp.lt.s32.totalorder %v239, 64
        %v242 = vsel %vm240, %v231, 0.0
        %v243 = vsel %vm241, %v232, 0.0
        %vm244 = vcmask 7168
        %v245 = vsel %vm244, %v242, 0.0
        %v246 = vsel %vm244, %v243, 0.0
        %v247 = vadd.f32 %v245, %v246
        %248 = vadd.xlane.f32.xlu0 %v247
        %v249 = vpop.xlane.xlu0 %248
        %v250 = vrot.slane %v249, 4
        %v251 = vadd.f32 %v249, %v250
        %v252 = vrot.slane %v251, 2
        %v253 = vadd.f32 %v251, %v252
        %v254 = vrot.slane %v253, 1
        %v255 = vadd.f32 %v253, %v254
        %s256 = vtos %v255
        %v257 = vstv %s256
        %258 = vst [vmem:[%s153] sm:$0xff] %v257
        %s259 = sand.u32 %s76, 1
        %s260 = scalar_lea.sflag [#allocation3], %s259
        %s261 = sand.u32 %s76, 1
        %s262 = smul.addr %s261, 8
        %s263 = scalar_lea.vmem [#allocation2], %s262
        // Predicated region
        $region29: #{tpu_custom_call.1} parent=27 // pred_check
          %p264 = pneg %p86
        $region30: #{tpu_custom_call.1} parent=27 // pred_check_branch
          %266 = sbr.rel (%p264) target = $region32
        $region31: #{tpu_custom_call.1} parent=27 // pred_region
          %s268 = ssub.s32 128, 128
          %269 = vsyncadd %s260, %s268
          %s270 = smul.addr %s16, 128
          %s271 = scalar_lea.hbm %s2, %s270
          %s273 = sshll.u32 %s263, 4
          %s274 = int_to_ptr.vmem [resolvable:$true] %s273
          %276 = dma.vmem_to_hbm [thread:$0]  %s274, 128, %s271, %s260
        $region32: #{tpu_custom_call.1} parent=27 // pred_fallthru
          _
      $region28: #{tpu_custom_call.1} parent=5 // pred_fallthru
        _
      %p277 = scmp.le.s32.totalorder 2, %s11
      // Predicated region
      $region33: #{tpu_custom_call.1} parent=5 // pred_check
        %p278 = pneg %p277
      $region34: #{tpu_custom_call.1} parent=5 // pred_check_branch
        %280 = sbr.rel (%p278) target = $region36
      $region35: #{tpu_custom_call.1} parent=5 // pred_region
        %s281 = ssub.s32 %s11, 2
        // Predicated region
        $region37: #{tpu_custom_call.1} parent=35 // pred_check
          %p282 = pneg %p92
        $region38: #{tpu_custom_call.1} parent=35 // pred_check_branch
          %284 = sbr.rel (%p282) target = $region40
        $region39: #{tpu_custom_call.1} parent=35 // pred_region
          %s285 = sand.u32 %s77, 1
          %s286 = scalar_lea.sflag [#allocation3], %s285
          %s287 = sand.u32 %s77, 1
          %s288 = smul.addr %s287, 8
          %s289 = scalar_lea.vmem [#allocation2], %s288
          %290 = dma.done %s286, 128
        $region40: #{tpu_custom_call.1} parent=35 // pred_fallthru
          _
      $region36: #{tpu_custom_call.1} parent=5 // pred_fallthru
        _
    $region6: #{tpu_custom_call.1} parent=1 // loop_footer
      %s15 = sadd.s32 1, %s11
    $region7: #{tpu_custom_call.1} parent=1 // loop_footer_branch
      %10 = sbr.rel target = $region3
    $region8: #{tpu_custom_call.1} parent=1 // loop_exit
      _
    %291 = vsyncpa [#allocation3], 1
    %s292 = scalar_lea.sflag [#allocation3], 1
    %293 = vsyncpa %s292, 1

</llo_original>
